<compile_context>
chip_gen: v5e
topology: v5e:2x2
jax: 0.10.0
libtpu: 0.0.40
codegen_flags: <defaults>
</compile_context>

<pallas_src>
import math
import jax
import jax.numpy as jnp
from jax import lax
from jax.experimental import pallas as pl
from jax.experimental.pallas import tpu as pltpu


_LANE = 128
_SUBLANE = 8
# Steady-state VMEM budget sized against the tightest core (v7x: 64 MiB physical).
_VMEM_BUDGET = 40 * 1024 * 1024
_VMEM_LIMIT = 48 << 20
# Keep the fused weight VMEM-resident when it is at most this many bytes.
_RESIDENT_W_BYTES = 16 * 1024 * 1024


def _round_up(x, m):
    return ((x + m - 1) // m) * m


def _pick_tile(size, candidates):
    for c in candidates:
        if size % c == 0:
            return c
    return size


# --------------------------------------------------------------------------------------
# Kernels
# --------------------------------------------------------------------------------------
def _fused_linear_resident_kernel(x_ref, w_ref, b_ref, o_ref):
    """o = x @ w + b with the whole fused weight resident in VMEM.

    x_ref: [tm, IN]      activations (streamed over the 1-D M grid)
    w_ref: [IN, N_pad]   fused, pre-transposed weight (grid-invariant -> DMA'd once)
    b_ref: [1,  N_pad]   fused bias (grid-invariant -> DMA'd once)
    o_ref: [tm, N_pad]   lane-dense output tile (N_pad is a multiple of 128)

    Single MXU dot, direct lane-dense store; no accumulator scratch needed.
    """
    o_ref[...] = (jnp.dot(x_ref[...], w_ref[...],
                          preferred_element_type=jnp.float32)
                  + b_ref[...]).astype(o_ref.dtype)


def _fused_linear_tiled_kernel(x_ref, w_ref, b_ref, o_ref, acc_ref):
    """Fallback tiled GEMM for configs whose fused weight does not fit in VMEM.

    x_ref: [tm, tk], w_ref: [tk, tn], b_ref: [1, tn], o_ref: [tm, tn],
    acc_ref: [tm, tn] f32 VMEM accumulator persisting across the K grid axis.
    """
    k = pl.program_id(2)

    @pl.when(k == 0)
    def _():
        acc_ref[...] = jnp.zeros_like(acc_ref)

    acc_ref[...] += jnp.dot(x_ref[...], w_ref[...],
                            preferred_element_type=jnp.float32)

    @pl.when(k == pl.num_programs(2) - 1)
    def _():
        o_ref[...] = (acc_ref[...] + b_ref[...]).astype(o_ref.dtype)


# --------------------------------------------------------------------------------------
# One-time parameter prep (equivalent of module init — NOT per call)
# --------------------------------------------------------------------------------------
def prepare_fused_params(weight_main, bias_main, weight_sass, bias_sass,
                         param_dtype=None):
    """Fuse main + sass params, zero-pad N to a multiple of 128, pre-transpose.

    Returns:
      w_fused: [IN, N_pad]  (lane-dense along N_pad, plain (K,N) contraction in kernel)
      b_fused: [1,  N_pad]
    """
    out_features, in_features = weight_main.shape
    sass_features = weight_sass.shape[0]
    n = out_features + sass_features
    n_pad = _round_up(n, _LANE)

    w_fused = jnp.concatenate([weight_main, weight_sass], axis=0)        # [N, IN]
    if n_pad != n:
        w_fused = jnp.pad(w_fused, ((0, n_pad - n), (0, 0)))             # [N_pad, IN]
    w_fused = w_fused.T                                                  # [IN, N_pad]

    b_fused = jnp.concatenate([bias_main, bias_sass], axis=0)            # [N]
    if n_pad != n:
        b_fused = jnp.pad(b_fused, (0, n_pad - n))
    b_fused = b_fused.reshape(1, n_pad)                                  # [1, N_pad]

    if param_dtype is not None:
        w_fused = w_fused.astype(param_dtype)
        b_fused = b_fused.astype(param_dtype)
    assert w_fused.shape == (in_features, n_pad)
    return w_fused, b_fused


# --------------------------------------------------------------------------------------
# Forward pass
# --------------------------------------------------------------------------------------
def self_assessment_forward(x, w_fused, b_fused, out_features, sass_features,
                            add_sass_features_to_output=False):
    """Pallas forward pass of the SelfAssessment module (fused GEMM)."""
    B, IN = x.shape
    in_w, N_pad = w_fused.shape
    assert in_w == IN, "weight IN dim must match input IN dim"
    n = out_features + sass_features
    assert n <= N_pad
    itemsize = jnp.dtype(x.dtype).itemsize

    # ---------------- M tiling ----------------
    B8 = _round_up(B, _SUBLANE)
    tm = min(512, B8)
    if B8 >= 256 and B8 // tm < 2:
        # >=2 M blocks so both v7x TensorCores get work (no-op on v5e/v6e, 1 TC).
        tm = _round_up((B8 + 1) // 2, _SUBLANE)

    w_bytes = IN * N_pad * itemsize
    resident = w_bytes <= _RESIDENT_W_BYTES

    if resident:
        # Shrink tm until double-buffered x/out tiles + resident weight fit the budget.
        def _vmem_need(t):
            return (2 * t * IN * itemsize          # x tiles (double-buffered)
                    + 2 * t * N_pad * itemsize     # out tiles
                    + 2 * w_bytes                  # weight (conservative 2x)
                    + 2 * N_pad * itemsize)        # bias
        while tm > _SUBLANE and _vmem_need(tm) > _VMEM_BUDGET:
            tm = max(_SUBLANE, _round_up(tm // 2, _SUBLANE))
    else:
        # Tiled fallback tiles.
        tn = _pick_tile(N_pad, (512, 256, 128))
        tk = _pick_tile(IN, (512, 256, 128)) if IN % _LANE == 0 else IN
        def _vmem_need_tiled(t):
            return 2 * (t * tk + tk * tn + t * tn + tn) * itemsize + t * tn * 4
        while tm > _SUBLANE and _vmem_need_tiled(tm) > _VMEM_BUDGET:
            tm = max(_SUBLANE, _round_up(tm // 2, _SUBLANE))

    B_pad = _round_up(B8, tm)
    if B_pad != B:
        x = jnp.pad(x, ((0, B_pad - B), (0, 0)))

    cost = pl.CostEstimate(
        flops=2 * B_pad * IN * N_pad,
        transcendentals=0,
        bytes_accessed=(B_pad * IN + IN * N_pad + N_pad + B_pad * N_pad) * itemsize,
    )

    if resident:
        grid = (B_pad // tm,)
        out_full = pl.pallas_call(
            _fused_linear_resident_kernel,
            out_shape=jax.ShapeDtypeStruct((B_pad, N_pad), x.dtype),
            grid_spec=pltpu.PrefetchScalarGridSpec(
                num_scalar_prefetch=0,
                grid=grid,
                in_specs=[
                    pl.BlockSpec((tm, IN), lambda i: (i, 0)),       # x: streams over M
                    pl.BlockSpec((IN, N_pad), lambda i: (0, 0)),    # weight: DMA'd once
                    pl.BlockSpec((1, N_pad), lambda i: (0, 0)),     # bias: DMA'd once
                ],
                out_specs=pl.BlockSpec((tm, N_pad), lambda i: (i, 0)),
            ),
            compiler_params=pltpu.CompilerParams(
                dimension_semantics=("parallel",),
                vmem_limit_bytes=_VMEM_LIMIT),
            cost_estimate=cost,
        )(x, w_fused, b_fused)
    else:
        grid = (B_pad // tm, N_pad // tn, IN // tk)
        out_full = pl.pallas_call(
            _fused_linear_tiled_kernel,
            out_shape=jax.ShapeDtypeStruct((B_pad, N_pad), x.dtype),
            grid_spec=pltpu.PrefetchScalarGridSpec(
                num_scalar_prefetch=0,
                grid=grid,
                in_specs=[
                    pl.BlockSpec((tm, tk), lambda i, j, k: (i, k)),   # x
                    pl.BlockSpec((tk, tn), lambda i, j, k: (k, j)),   # weight [IN, N_pad]
                    pl.BlockSpec((1, tn), lambda i, j, k: (0, j)),    # bias
                ],
                out_specs=pl.BlockSpec((tm, tn), lambda i, j, k: (i, j)),
                scratch_shapes=[pltpu.VMEM((tm, tn), jnp.float32)],
            ),
            compiler_params=pltpu.CompilerParams(
                dimension_semantics=("parallel", "parallel", "arbitrary"),
                vmem_limit_bytes=_VMEM_LIMIT),
            cost_estimate=cost,
        )(x, w_fused, b_fused)

    if add_sass_features_to_output:
        # output_combiner_main / output_combiner_sass in the PyTorch module are pure
        # 0/1 selection matrices -> the combined output is exactly
        # concat([output_main, output_sass], axis=1) == first OUT+SASS fused columns.
        return out_full[:B, :n]
    out = out_full[:B, :n]                    # single slice, split lazily
    return out[:, :out_features], out[:, out_features:]


# --------------------------------------------------------------------------------------
# Init matching PyTorch reset_parameters()
# --------------------------------------------------------------------------------------
def init_self_assessment_params(key, in_features, out_features, sass_features):
    """kaiming_uniform_(a=sqrt(5)) == U(-1/sqrt(fan_in), 1/sqrt(fan_in)); same for bias."""
    k1, k2, k3, k4 = jax.random.split(key, 4)
    bound = 1.0 / math.sqrt(in_features)
    weight_main = jax.random.uniform(
        k1, (out_features, in_features), jnp.float32, -bound, bound)
    bias_main = jax.random.uniform(k2, (out_features,), jnp.float32, -bound, bound)
    weight_sass = jax.random.uniform(
        k3, (sass_features, in_features), jnp.float32, -bound, bound)
    bias_sass = jax.random.uniform(k4, (sass_features,), jnp.float32, -bound, bound)
    return weight_main, bias_main, weight_sass, bias_sass


def _reference(x, weight_main, bias_main, weight_sass, bias_sass):
    ref_main = x @ weight_main.T + bias_main[None, :]
    ref_sass = x @ weight_sass.T + bias_sass[None, :]
    return ref_main, ref_sass


if __name__ == "__main__":
    key = jax.random.PRNGKey(0)
    IN, OUT, SASS = 32, 16, 4   # out_features must be a multiple of sass_features

    kx, kx2, kx3, kp = jax.random.split(key, 4)
    weight_main, bias_main, weight_sass, bias_sass = init_self_assessment_params(
        kp, IN, OUT, SASS)
    # One-time fused/padded/transposed parameter prep (equivalent of module init).
    w_fused, b_fused = prepare_fused_params(
        weight_main, bias_main, weight_sass, bias_sass)

    # --- case 1: sublane-aligned batch, separate outputs + combined output ---
    B = 8
    x = jax.random.normal(kx, (B, IN), dtype=jnp.float32)
    out_main, out_sass = self_assessment_forward(
        x, w_fused, b_fused, OUT, SASS, add_sass_features_to_output=False)
    combined = self_assessment_forward(
        x, w_fused, b_fused, OUT, SASS, add_sass_features_to_output=True)
    jax.block_until_ready((out_main, out_sass, combined))

    ref_main, ref_sass = _reference(x, weight_main, bias_main, weight_sass, bias_sass)
    ref_combined = jnp.concatenate([ref_main, ref_sass], axis=1)
    assert out_main.shape == (B, OUT)
    assert out_sass.shape == (B, SASS)
    assert combined.shape == (B, OUT + SASS)
    assert jnp.allclose(out_main, ref_main, atol=1e-5, rtol=1e-5)
    assert jnp.allclose(out_sass, ref_sass, atol=1e-5, rtol=1e-5)
    assert jnp.allclose(combined, ref_combined, atol=1e-5, rtol=1e-5)

    # --- case 2: ragged batch (exercises the batch-padding path) ---
    B2 = 5
    x2 = jax.random.normal(kx2, (B2, IN), dtype=jnp.float32)
    out_main2, out_sass2 = self_assessment_forward(
        x2, w_fused, b_fused, OUT, SASS, add_sass_features_to_output=False)
    jax.block_until_ready((out_main2, out_sass2))
    ref_main2, ref_sass2 = _reference(x2, weight_main, bias_main, weight_sass, bias_sass)
    assert out_main2.shape == (B2, OUT)
    assert out_sass2.shape == (B2, SASS)
    assert jnp.allclose(out_main2, ref_main2, atol=1e-5, rtol=1e-5)
    assert jnp.allclose(out_sass2, ref_sass2, atol=1e-5, rtol=1e-5)

    # --- case 3: larger batch (exercises >=2 parallel M blocks + tile padding) ---
    B3 = 300
    x3 = jax.random.normal(kx3, (B3, IN), dtype=jnp.float32)
    combined3 = self_assessment_forward(
        x3, w_fused, b_fused, OUT, SASS, add_sass_features_to_output=True)
    jax.block_until_ready(combined3)
    ref_main3, ref_sass3 = _reference(x3, weight_main, bias_main, weight_sass, bias_sass)
    ref_combined3 = jnp.concatenate([ref_main3, ref_sass3], axis=1)
    assert combined3.shape == (B3, OUT + SASS)
    assert jnp.allclose(combined3, ref_combined3, atol=1e-5, rtol=1e-5)

    print("KERNEL_OK")
</pallas_src>

<mosaic_0001>
module attributes {stable_mosaic.version = 11 : i64} {
  func.func @_fused_linear_resident_kernel(%arg0: i32, %arg1: memref<8x32xf32, #tpu.memory_space<vmem>>, %arg2: memref<32x128xf32, #tpu.memory_space<vmem>>, %arg3: memref<1x128xf32, #tpu.memory_space<vmem>>, %arg4: memref<8x128xf32, #tpu.memory_space<vmem>>) attributes {dimension_semantics = [#tpu.dimension_semantics<parallel>], iteration_bounds = array<i64: 1>, scalar_prefetch = 0 : i64, scratch_operands = 0 : i64, tpu.core_type = #tpu.core_type<tc>, window_params = [{transform_indices = @transform_0, window_bounds = array<i64: 8, 32>}, {pipeline_mode = #tpu.pipeline_mode<synchronous>, transform_indices = @transform_1, window_bounds = array<i64: 32, 128>}, {pipeline_mode = #tpu.pipeline_mode<synchronous>, transform_indices = @transform_2, window_bounds = array<i64: 1, 128>}, {transform_indices = @transform_3, window_bounds = array<i64: 8, 128>}]} {
    %c0 = arith.constant 0 : index
    %c0_0 = arith.constant 0 : index
    %0 = vector.load %arg1[%c0, %c0_0] : memref<8x32xf32, #tpu.memory_space<vmem>>, vector<8x32xf32>
    %c0_1 = arith.constant 0 : index
    %c0_2 = arith.constant 0 : index
    %1 = vector.load %arg2[%c0_1, %c0_2] : memref<32x128xf32, #tpu.memory_space<vmem>>, vector<32x128xf32>
    %cst = arith.constant dense<0.000000e+00> : vector<8x128xf32>
    %2 = tpu.matmul %0, %1, %cst {dimension_numbers = #tpu.dot_dimension_numbers<[1], [0], [0], [1], [0, 0, 1, 1], [], []>} : vector<8x32xf32>, vector<32x128xf32>, vector<8x128xf32> -> vector<8x128xf32>
    %c0_3 = arith.constant 0 : index
    %c0_4 = arith.constant 0 : index
    %3 = vector.load %arg3[%c0_3, %c0_4] : memref<1x128xf32, #tpu.memory_space<vmem>>, vector<1x128xf32>
    %4 = vector.broadcast %3 : vector<1x128xf32> to vector<8x128xf32>
    %5 = arith.addf %2, %4 : vector<8x128xf32>
    %c0_5 = arith.constant 0 : index
    %c0_6 = arith.constant 0 : index
    %6 = vector.load %arg4[%c0_5, %c0_6] : memref<8x128xf32, #tpu.memory_space<vmem>>, vector<8x128xf32>
    tpu.vector_store %arg4[%c0_5, %c0_6], %5 {strides = array<i32>} : memref<8x128xf32, #tpu.memory_space<vmem>>, vector<8x128xf32>,
    return
  }
  func.func @transform_0(%arg0: i32) -> (i32, i32) {
    %c0_i32 = arith.constant 0 : i32
    %c0_i32_0 = arith.constant 0 : i32
    return %arg0, %c0_i32 : i32, i32
  }
  func.func @transform_1(%arg0: i32) -> (i32, i32) {
    %c0_i32 = arith.constant 0 : i32
    %c0_i32_0 = arith.constant 0 : i32
    %c0_i32_1 = arith.constant 0 : i32
    return %c0_i32, %c0_i32_0 : i32, i32
  }
  func.func @transform_2(%arg0: i32) -> (i32, i32) {
    %c0_i32 = arith.constant 0 : i32
    %c0_i32_0 = arith.constant 0 : i32
    %c0_i32_1 = arith.constant 0 : i32
    return %c0_i32, %c0_i32_0 : i32, i32
  }
  func.func @transform_3(%arg0: i32) -> (i32, i32) {
    %c0_i32 = arith.constant 0 : i32
    %c0_i32_0 = arith.constant 0 : i32
    return %arg0, %c0_i32 : i32, i32
  }
}

</mosaic_0001>

<llo_original>
// kernel: tpu_custom_call.1
$region0: #{tpu_custom_call.1}
  #allocation0 [shape = 'u32[]', space=smem, size = 0x4, offset = 0x4, fixed_abs, tag = 'smem constant byte address 0x4 - core index']
  #allocation1 [shape = 'u32[72,128]{1,0:T(1,128)}', space=vmem, size = 0x9000, scoped, tag = 'internal scratch']
  %s0 = inlined_call_operand.hbm [shape: f32[8,32], index: 0, kind: input, shape index: {}]
  %s1 = inlined_call_operand.hbm [shape: f32[32,128], index: 1, kind: input, shape index: {}]
  %s2 = inlined_call_operand.vmem [shape: f32[1,128], index: 2, kind: input, shape index: {}]
  %s3 = inlined_call_operand.hbm [shape: f32[8,128], index: 3, kind: output, shape index: {}]
  %s4 = sld [smem:[#allocation0]]
  $region30: #{tpu_custom_call.1} parent=0
    _
  %s6 = ssub.s32 1, %s4
  %s7 = scalar_select 0, %s6, %s4
  $region1: #{tpu_custom_call.1} parent=0
    #allocation2 [shape = 'u8[4096]{0}', space=vmem, size = 0x1000, scoped, tag = 'input window, operand 0, single buffered']
    #allocation3 [shape = 's32[1]{0}', space=sflag, size = 0x4, scoped, tag = 'scoped memory for tpu_custom_call.1']
    #allocation4 [shape = 's32[1]{0}', space=sflag, size = 0x4, scoped, tag = 'scoped memory for tpu_custom_call.1']
    #allocation5 [shape = 'u8[16384]{0}', space=vmem, size = 0x4000, scoped, tag = 'input window, operand 1, single buffered']
    #allocation6 [shape = 's32[1]{0}', space=sflag, size = 0x4, scoped, tag = 'scoped memory for tpu_custom_call.1']
    #allocation7 [shape = 'u8[4096]{0}', space=vmem, size = 0x1000, scoped, tag = 'output window, operand 0, single buffered']
    %8 = vsyncpa [#allocation3], 0
    %9 = vsyncpa [#allocation6], 0
    %10 = vsyncpa [#allocation4], 0
    // Predicated region
    $region2: #{tpu_custom_call.1} parent=1 // pred_check
      _
    $region3: #{tpu_custom_call.1} parent=1 // pred_check_branch
      %12 = sbr.rel (0) target = $region5
    $region4: #{tpu_custom_call.1} parent=1 // pred_region
      %14 = vsyncadd [#allocation3], 0
      %s16 = sshll.u32 %s0, 4
      %s17 = int_to_ptr.hbm [resolvable:$true] %s16
      %s18 = sshll.u32 [#allocation2], 4
      %s19 = int_to_ptr.vmem [resolvable:$true] %s18
      %21 = dma.hbm_to_vmem [thread:$0]  %s17, 128, %s19, [#allocation3]
    $region5: #{tpu_custom_call.1} parent=1 // pred_fallthru
      _
    // Predicated region
    $region6: #{tpu_custom_call.1} parent=1 // pred_check
      _
    $region7: #{tpu_custom_call.1} parent=1 // pred_check_branch
      %23 = sbr.rel (0) target = $region9
    $region8: #{tpu_custom_call.1} parent=1 // pred_region
      %25 = vsyncadd [#allocation6], 0
      %s26 = sshll.u32 %s1, 4
      %s27 = int_to_ptr.hbm [resolvable:$true] %s26
      %s28 = sshll.u32 [#allocation5], 4
      %s29 = int_to_ptr.vmem [resolvable:$true] %s28
      %34 = dma.hbm_to_vmem [thread:$0]  %s27, 512, %s29, [#allocation6], 128, 128, 8
    $region9: #{tpu_custom_call.1} parent=1 // pred_fallthru
      _
    // Predicated region
    $region10: #{tpu_custom_call.1} parent=1 // pred_check
      _
    $region11: #{tpu_custom_call.1} parent=1 // pred_check_branch
      %36 = sbr.rel (0) target = $region13
    $region12: #{tpu_custom_call.1} parent=1 // pred_region
      _
    $region13: #{tpu_custom_call.1} parent=1 // pred_fallthru
      _
    // Predicated region
    $region14: #{tpu_custom_call.1} parent=1 // pred_check
      _
    $region15: #{tpu_custom_call.1} parent=1 // pred_check_branch
      %38 = sbr.rel (0) target = $region17
    $region16: #{tpu_custom_call.1} parent=1 // pred_region
      %40 = dma.done [#allocation3], 128
    $region17: #{tpu_custom_call.1} parent=1 // pred_fallthru
      _
    // Predicated region
    $region18: #{tpu_custom_call.1} parent=1 // pred_check
      _
    $region19: #{tpu_custom_call.1} parent=1 // pred_check_branch
      %42 = sbr.rel (0) target = $region21
    $region20: #{tpu_custom_call.1} parent=1 // pred_region
      %44 = dma.done [#allocation6], 512
    $region21: #{tpu_custom_call.1} parent=1 // pred_fallthru
      _
    %v45 = vld [vmem:[#allocation2] sm:$0xff]
    %v46 = vld [vmem:[#allocation5] sm:$0xff]
    %v47 = vld [vmem:[#allocation5 + $0x8] sm:$0xff]
    %v48 = vld [vmem:[#allocation5 + $0x10] sm:$0xff]
    %v49 = vld [vmem:[#allocation5 + $0x18] sm:$0xff]
    %v50 = vld [vmem:[%s2] sm:$0x1]
    %v52 = vperm.slane %v50, 0
    %vm54 = vcmask 261120
    %v56 = vsel %vm54, %v45, 0
    %58 = vmatpush.msra.mxu0 0.0
    %59 = vmatpush.msra.mxu0 0.0
    %60 = vmatpush.msra.mxu0 0.0
    %61 = vmatpush.msra.mxu0 0.0
    %62 = vmatpush.msra.mxu0 0.0
    %63 = vmatpush.msra.mxu0 0.0
    %64 = vmatpush.msra.mxu0 0.0
    %65 = vmatpush.msra.mxu0 0.0
    %66 = vmatpush.msra.mxu0 0.0
    %67 = vmatpush.msra.mxu0 0.0
    %68 = vmatpush.msra.mxu0 0.0
    %69 = vmatpush.msra.mxu0 0.0
    %70 = vmatpush.msra.mxu0 %v49
    %71 = vmatpush.msra.mxu0 %v48
    %72 = vmatpush.msra.mxu0 %v47
    %73 = vmatpush.msra.mxu0 %v46
    %74 = vmatmul.f32.gmra.mxu0 %v56
    %v75 = vpop.f32.mrf.mxu0
    %v76 = vadd.f32 %v52, %v75
    %77 = vdwg.mxu0
    %78 = vst [vmem:[#allocation7] sm:$0xff] %v76
    // Predicated region
    $region22: #{tpu_custom_call.1} parent=1 // pred_check
      _
    $region23: #{tpu_custom_call.1} parent=1 // pred_check_branch
      %80 = sbr.rel (0) target = $region25
    $region24: #{tpu_custom_call.1} parent=1 // pred_region
      %82 = vsyncadd [#allocation4], 0
      %s84 = sshll.u32 [#allocation7], 4
      %s85 = int_to_ptr.vmem [resolvable:$true] %s84
      %s86 = sshll.u32 %s3, 4
      %s87 = int_to_ptr.hbm [resolvable:$true] %s86
      %89 = dma.vmem_to_hbm [thread:$0]  %s85, 128, %s87, [#allocation4]
    $region25: #{tpu_custom_call.1} parent=1 // pred_fallthru
      _
    // Predicated region
    $region26: #{tpu_custom_call.1} parent=1 // pred_check
      _
    $region27: #{tpu_custom_call.1} parent=1 // pred_check_branch
      %91 = sbr.rel (0) target = $region29
    $region28: #{tpu_custom_call.1} parent=1 // pred_region
      %93 = dma.done [#allocation4], 128
    $region29: #{tpu_custom_call.1} parent=1 // pred_fallthru
      _
    %94 = vsyncpa [#allocation3], 1
    %95 = vsyncpa [#allocation6], 1
    %96 = vsyncpa [#allocation4], 1

</llo_original>
